<compile_context>
chip_gen: v7x
topology: tpu7x:2x2x1
jax: 0.10.0
libtpu: 0.0.40
codegen_flags: <defaults>
</compile_context>

<pallas_src>
import math
from functools import partial

import jax
import jax.numpy as jnp
from jax import lax
from jax.experimental import pallas as pl
from jax.experimental.pallas import tpu as pltpu

_LANE = 128
_SUBLANE = 8
_INV_SQRT2 = 1.0 / math.sqrt(2.0)
_MIB = 1024 * 1024


def _cdiv(a, b):
    return -(-a // b)


def _round_up(x, m):
    return _cdiv(x, m) * m


# ----------------------- hardware introspection (defensive) -----------------------

def _vmem_capacity_bytes():
    try:
        cap = int(pltpu.get_tpu_info().vmem_capacity_bytes)
        if cap > 0:
            return cap
    except Exception:
        pass
    try:
        kind = jax.devices()[0].device_kind.lower()
        if "7" in kind:              # v7x: 64 MiB per TensorCore
            return 64 * _MIB
        return 128 * _MIB            # v4 / v5e / v5p / v6e
    except Exception:
        pass
    return 64 * _MIB                 # conservative default


def _num_tensorcores():
    try:
        info = pltpu.get_tpu_info()
        for name in ("num_cores", "core_count", "num_tensorcores",
                     "tensorcores_per_chip", "num_tensor_cores"):
            v = getattr(info, name, None)
            if isinstance(v, int) and 0 < v <= 8:
                return v
    except Exception:
        pass
    try:
        kind = jax.devices()[0].device_kind.lower()
        if "7" in kind or "7x" in kind:
            return 2
    except Exception:
        pass
    return 1                         # safe default: skip 2-TC-only padding


# ----------------------------------- kernels -----------------------------------

def _mlp_resident_kernel(x_ref, w1_ref, b1_ref, w2_ref, b2_ref, o_ref,
                         *, hc, n_chunks, compute_dtype):
    """Weights fully resident in VMEM; hidden dim processed in `hc`-wide chunks."""
    x = x_ref[...]                                   # (tm, C_in)
    if compute_dtype is not None:
        x = x.astype(compute_dtype)
    acc = None                                       # (tm, C_out) f32
    for k in range(n_chunks):                        # fully unrolled, static slices
        lo = k * hc
        hi = lo + hc
        w1c = w1_ref[:, lo:hi]                       # (C_in, hc)
        w2c = w2_ref[lo:hi, :]                       # (hc, C_out)
        if compute_dtype is not None:
            w1c = w1c.astype(compute_dtype)
            w2c = w2c.astype(compute_dtype)
        h = jnp.dot(x, w1c, preferred_element_type=jnp.float32)
        h = h + b1_ref[:, lo:hi].astype(jnp.float32)
        h = 0.5 * h * (1.0 + lax.erf(h * _INV_SQRT2))     # exact erf GELU
        h = h.astype(x.dtype)                              # bf16 MXU rate when bf16
        part = jnp.dot(h, w2c, preferred_element_type=jnp.float32)
        acc = part if acc is None else acc + part
    acc = acc + b2_ref[...].astype(jnp.float32)
    o_ref[...] = acc.astype(o_ref.dtype)


def _mlp_streaming_kernel(x_ref, w1_ref, b1_ref, w2_ref, b2_ref, o_ref, acc_ref,
                          *, compute_dtype):
    """Hidden dim tiled over the grid (weights streamed); f32 accumulator scratch."""
    j = pl.program_id(1)

    @pl.when(j == 0)
    def _():
        acc_ref[...] = jnp.zeros_like(acc_ref)

    x = x_ref[...]
    w1 = w1_ref[...]
    w2 = w2_ref[...]
    if compute_dtype is not None:
        x = x.astype(compute_dtype)
        w1 = w1.astype(compute_dtype)
        w2 = w2.astype(compute_dtype)
    h = jnp.dot(x, w1, preferred_element_type=jnp.float32)
    h = h + b1_ref[...].astype(jnp.float32)
    h = 0.5 * h * (1.0 + lax.erf(h * _INV_SQRT2))
    h = h.astype(x.dtype)
    acc_ref[...] += jnp.dot(h, w2, preferred_element_type=jnp.float32)

    @pl.when(j == pl.num_programs(1) - 1)
    def _():
        o_ref[...] = (acc_ref[...] + b2_ref[...].astype(jnp.float32)).astype(o_ref.dtype)


# ------------------------------ VMEM sizing helpers ------------------------------

def _vmem_resident(tm, c_in, h, c_out, hc, x_item, w_item, weight_buffers):
    io_bytes = 2 * tm * (c_in + c_out) * x_item                       # double-buffered x/out
    w_bytes = weight_buffers * (c_in * h + h * c_out + h + c_out) * w_item
    live_f32 = tm * (2 * hc + c_out) * 4                              # chunk slabs + acc
    return io_bytes + w_bytes + live_f32


def _vmem_streaming(tm, c_in, th, c_out, x_item, w_item):
    io_bytes = 2 * tm * (c_in + c_out) * x_item
    w_bytes = 2 * (c_in * th + th * c_out + th + c_out) * w_item      # streamed, dbl-buffered
    live_f32 = tm * (2 * th + c_out) * 4 + tm * c_out * 4             # slab + acc scratch
    return io_bytes + w_bytes + live_f32


def _choose_chunk(h_p, cap=512):
    if h_p <= cap:
        return h_p
    for c in (512, 384, 256, 128):
        if c <= cap and h_p % c == 0:
            return c
    return 128


def _choose_tm(m, budget, est_fn, tm_max=2048, tm_min=256):
    m_pad = max(_SUBLANE, _round_up(m, _SUBLANE))
    if m_pad <= 1024:
        tm = m_pad
    else:
        n0 = _cdiv(m_pad, tm_max)
        tm = min(tm_max, _round_up(_cdiv(m_pad, n0), 256))
    floor = min(tm, tm_min)
    while tm > floor and est_fn(tm) > budget:
        tm = max(floor, _round_up(tm // 2, _SUBLANE))
    if est_fn(tm) > budget:
        return None
    return tm


def _pad2(a, rows, cols):
    if rows == 0 and cols == 0:
        return a
    return jnp.pad(a, ((0, rows), (0, cols)))


# ----------------------------------- wrapper -----------------------------------

def mlp_forward(x, w1, b1, w2, b2, *, matmul_dtype=None):
    """Channels-last MLP: y = fc2(GELU(fc1(x))).  Weights stored (in, out).
    matmul_dtype (e.g. jnp.bfloat16) optionally casts matmul operands for MXU rate."""
    lead = x.shape[:-1]
    C_in = x.shape[-1]
    H = w1.shape[1]
    C_out = w2.shape[1]
    assert w1.shape[0] == C_in and w2.shape[0] == H
    b1 = jnp.asarray(b1).reshape(1, H)
    b2 = jnp.asarray(b2).reshape(1, C_out)

    x_tok = x.reshape(-1, C_in)
    M = x_tok.shape[0]

    # Lane-dense (128-aligned) feature dims -> unmasked vector loads/stores.
    C_in_p, H_p, C_out_p = (_round_up(d, _LANE) for d in (C_in, H, C_out))

    x_item = jnp.dtype(x.dtype).itemsize
    w_item = jnp.dtype(w1.dtype).itemsize

    capacity = _vmem_capacity_bytes()
    budget = capacity - max(16 * _MIB, capacity // 5)   # ~102 MiB on 128 MiB, ~48 MiB on v7x
    num_tc = _num_tensorcores()

    hc = _choose_chunk(H_p)
    tm = _choose_tm(M, budget,
                    lambda t: _vmem_resident(t, C_in_p, H_p, C_out_p, hc, x_item, w_item, 1))
    streaming = tm is None
    th = None
    if streaming:
        tm = _choose_tm(M, budget,
                        lambda t: _vmem_streaming(t, C_in_p, 128, C_out_p, x_item, w_item))
        if tm is None:
            tm = min(max(_SUBLANE, _round_up(M, _SUBLANE)), 128)   # last resort
        th = 128
        for cand in (512, 384, 256):
            if H_p % cand == 0 and _vmem_streaming(tm, C_in_p, cand, C_out_p,
                                                   x_item, w_item) <= budget:
                th = cand
                break

    # 2-TensorCore (v7x) grid shaping; skipped entirely on 1-TC chips.
    n_tiles = _cdiv(M, tm)
    if num_tc >= 2:
        if n_tiles == 1 and M > 256:
            tm = min(tm, _round_up(_cdiv(M, 2), 256))   # give both cores a tile
            n_tiles = _cdiv(M, tm)
        if n_tiles > 1 and n_tiles % num_tc != 0:
            n_tiles = _round_up(n_tiles, num_tc)
    M_p = n_tiles * tm

    # Pad operands (no-op / skipped when already aligned).
    x_p = _pad2(x_tok, M_p - M, C_in_p - C_in)
    w1_p = _pad2(w1, C_in_p - C_in, H_p - H)
    b1_p = _pad2(b1, 0, H_p - H)
    w2_p = _pad2(w2, H_p - H, C_out_p - C_out)
    b2_p = _pad2(b2, 0, C_out_p - C_out)
    # TODO(synk): in production, pre-pad weights once at init instead of per call.

    cost = pl.CostEstimate(
        flops=2 * M_p * (C_in_p * H_p + H_p * C_out_p),
        transcendentals=M_p * H_p,
        bytes_accessed=(M_p * (C_in_p + C_out_p) * x_item
                        + (C_in_p * H_p + H_p * C_out_p + H_p + C_out_p) * w_item),
    )
    out_shape = jax.ShapeDtypeStruct((M_p, C_out_p), x.dtype)

    if not streaming:
        n_chunks = H_p // hc
        kernel = partial(_mlp_resident_kernel, hc=hc, n_chunks=n_chunks,
                         compute_dtype=matmul_dtype)

        def call(weight_buffers):
            wkw = {"pipeline_mode": pl.Buffered(1)} if weight_buffers == 1 else {}
            est = _vmem_resident(tm, C_in_p, H_p, C_out_p, hc, x_item, w_item, weight_buffers)
            vmem_limit = int(min(capacity - 8 * _MIB, max(48 * _MIB, int(est * 1.25))))
            return pl.pallas_call(
                kernel,
                out_shape=out_shape,
                grid_spec=pltpu.PrefetchScalarGridSpec(
                    num_scalar_prefetch=0,
                    grid=(M_p // tm,),
                    in_specs=[
                        pl.BlockSpec((tm, C_in_p), lambda i: (i, 0)),          # x tile
                        pl.BlockSpec((C_in_p, H_p), lambda i: (0, 0), **wkw),  # w1 resident
                        pl.BlockSpec((1, H_p), lambda i: (0, 0), **wkw),       # b1 resident
                        pl.BlockSpec((H_p, C_out_p), lambda i: (0, 0), **wkw), # w2 resident
                        pl.BlockSpec((1, C_out_p), lambda i: (0, 0), **wkw),   # b2 resident
                    ],
                    out_specs=pl.BlockSpec((tm, C_out_p), lambda i: (i, 0)),
                ),
                compiler_params=pltpu.CompilerParams(
                    dimension_semantics=("parallel",),
                    vmem_limit_bytes=vmem_limit,
                ),
                cost_estimate=cost,
            )(x_p, w1_p, b1_p, w2_p, b2_p)

        try:
            y_p = call(1)        # single-buffered resident weights (never re-fetched)
        except Exception:
            y_p = call(2)        # fallback: default buffering, limit recomputed for it
    else:
        kernel = partial(_mlp_streaming_kernel, compute_dtype=matmul_dtype)
        est = _vmem_streaming(tm, C_in_p, th, C_out_p, x_item, w_item)
        vmem_limit = int(min(capacity - 8 * _MIB, max(48 * _MIB, int(est * 1.25))))
        y_p = pl.pallas_call(
            kernel,
            out_shape=out_shape,
            grid_spec=pltpu.PrefetchScalarGridSpec(
                num_scalar_prefetch=0,
                grid=(M_p // tm, H_p // th),
                in_specs=[
                    pl.BlockSpec((tm, C_in_p), lambda i, j: (i, 0)),
                    pl.BlockSpec((C_in_p, th), lambda i, j: (0, j)),
                    pl.BlockSpec((1, th), lambda i, j: (0, j)),
                    pl.BlockSpec((th, C_out_p), lambda i, j: (j, 0)),
                    pl.BlockSpec((1, C_out_p), lambda i, j: (0, 0)),
                ],
                out_specs=pl.BlockSpec((tm, C_out_p), lambda i, j: (i, 0)),
                scratch_shapes=[pltpu.VMEM((tm, C_out_p), jnp.float32)],
            ),
            compiler_params=pltpu.CompilerParams(
                dimension_semantics=("parallel", "arbitrary"),
                vmem_limit_bytes=vmem_limit,
            ),
            cost_estimate=cost,
        )(x_p, w1_p, b1_p, w2_p, b2_p)

    y = y_p[:M, :C_out]
    return y.reshape(*lead, C_out)


def init_params(key, in_features, hidden_features, out_features, dtype=jnp.float32):
    """Deterministic init mimicking nn.Linear default (uniform(-1/sqrt(fan_in), +))."""
    k1, k2, k3, k4 = jax.random.split(key, 4)
    bound1 = 1.0 / math.sqrt(in_features)
    bound2 = 1.0 / math.sqrt(hidden_features)
    w1 = jax.random.uniform(k1, (in_features, hidden_features), dtype, -bound1, bound1)
    b1 = jax.random.uniform(k2, (1, hidden_features), dtype, -bound1, bound1)
    w2 = jax.random.uniform(k3, (hidden_features, out_features), dtype, -bound2, bound2)
    b2 = jax.random.uniform(k4, (1, out_features), dtype, -bound2, bound2)
    return w1, b1, w2, b2


if __name__ == "__main__":
    key = jax.random.PRNGKey(0)
    kx, kp, kx2, kp2 = jax.random.split(key, 4)

    def reference(x, w1, b1, w2, b2):
        h = x.reshape(-1, x.shape[-1]) @ w1 + b1
        h = 0.5 * h * (1.0 + lax.erf(h * _INV_SQRT2))
        y = h @ w2 + b2
        return y.reshape(*x.shape[:-1], w2.shape[1])

    # Case 1: small AFNO-style (B, H, W, C) channels-last tokens.
    B, Hs, Ws, C_in = 2, 8, 8, 16
    hidden = 32
    x = jax.random.normal(kx, (B, Hs, Ws, C_in), dtype=jnp.float32)
    w1, b1, w2, b2 = init_params(kp, C_in, hidden, C_in)  # out_features defaults to in
    y = jax.block_until_ready(mlp_forward(x, w1, b1, w2, b2))
    y_ref = reference(x, w1, b1, w2, b2)
    assert y.shape == y_ref.shape
    assert jnp.allclose(y, y_ref, atol=2e-5, rtol=2e-5), "case-1 mismatch vs reference"

    # Case 2: larger token count -> multi-tile token grid.
    B2, Hs2, Ws2, C2, hid2 = 4, 32, 32, 24, 40
    x2 = jax.random.normal(kx2, (B2, Hs2, Ws2, C2), dtype=jnp.float32)
    w1b, b1b, w2b, b2b = init_params(kp2, C2, hid2, C2)
    y2 = jax.block_until_ready(mlp_forward(x2, w1b, b1b, w2b, b2b))
    y2_ref = reference(x2, w1b, b1b, w2b, b2b)
    assert y2.shape == y2_ref.shape
    assert jnp.allclose(y2, y2_ref, atol=2e-5, rtol=2e-5), "case-2 mismatch vs reference"

    print("KERNEL_OK")
</pallas_src>

<mosaic_0001>
module attributes {stable_mosaic.version = 11 : i64} {
  func.func @_mlp_resident_kernel(%arg0: i32, %arg1: memref<128x128xf32, #tpu.memory_space<vmem>>, %arg2: memref<128x128xf32, #tpu.memory_space<vmem>>, %arg3: memref<1x128xf32, #tpu.memory_space<vmem>>, %arg4: memref<128x128xf32, #tpu.memory_space<vmem>>, %arg5: memref<1x128xf32, #tpu.memory_space<vmem>>, %arg6: memref<128x128xf32, #tpu.memory_space<vmem>>) attributes {dimension_semantics = [#tpu.dimension_semantics<parallel>], iteration_bounds = array<i64: 1>, scalar_prefetch = 0 : i64, scratch_operands = 0 : i64, tpu.core_type = #tpu.core_type<tc>, window_params = [{transform_indices = @transform_0, window_bounds = array<i64: 128, 128>}, {pipeline_mode = #tpu.pipeline_mode<synchronous>, transform_indices = @transform_1, window_bounds = array<i64: 128, 128>}, {pipeline_mode = #tpu.pipeline_mode<synchronous>, transform_indices = @transform_2, window_bounds = array<i64: 1, 128>}, {pipeline_mode = #tpu.pipeline_mode<synchronous>, transform_indices = @transform_3, window_bounds = array<i64: 128, 128>}, {pipeline_mode = #tpu.pipeline_mode<synchronous>, transform_indices = @transform_4, window_bounds = array<i64: 1, 128>}, {transform_indices = @transform_5, window_bounds = array<i64: 128, 128>}]} {
    %c0 = arith.constant 0 : index
    %c0_0 = arith.constant 0 : index
    %0 = vector.load %arg1[%c0, %c0_0] : memref<128x128xf32, #tpu.memory_space<vmem>>, vector<128x128xf32>
    %c0_1 = arith.constant 0 : index
    %c0_2 = arith.constant 0 : index
    %1 = vector.load %arg2[%c0_1, %c0_2] : memref<128x128xf32, #tpu.memory_space<vmem>>, vector<128x128xf32>
    %c0_3 = arith.constant 0 : index
    %c0_4 = arith.constant 0 : index
    %2 = vector.load %arg4[%c0_3, %c0_4] : memref<128x128xf32, #tpu.memory_space<vmem>>, vector<128x128xf32>
    %cst = arith.constant dense<0.000000e+00> : vector<128x128xf32>
    %3 = tpu.matmul %0, %1, %cst {dimension_numbers = #tpu.dot_dimension_numbers<[1], [0], [0], [1], [0, 0, 1, 1], [], []>} : vector<128x128xf32>, vector<128x128xf32>, vector<128x128xf32> -> vector<128x128xf32>
    %c0_5 = arith.constant 0 : index
    %c0_6 = arith.constant 0 : index
    %4 = vector.load %arg3[%c0_5, %c0_6] : memref<1x128xf32, #tpu.memory_space<vmem>>, vector<1x128xf32>
    %5 = vector.broadcast %4 : vector<1x128xf32> to vector<128x128xf32>
    %6 = arith.addf %3, %5 : vector<128x128xf32>
    %cst_7 = arith.constant 5.000000e-01 : f32
    %7 = vector.broadcast %cst_7 : f32 to vector<128x128xf32>
    %8 = arith.mulf %7, %6 : vector<128x128xf32>
    %cst_8 = arith.constant 0.707106769 : f32
    %9 = vector.broadcast %cst_8 : f32 to vector<128x128xf32>
    %10 = arith.mulf %6, %9 : vector<128x128xf32>
    %11 = math.erf %10 : vector<128x128xf32>
    %cst_9 = arith.constant 1.000000e+00 : f32
    %12 = vector.broadcast %cst_9 : f32 to vector<128x128xf32>
    %13 = arith.addf %12, %11 : vector<128x128xf32>
    %14 = arith.mulf %8, %13 : vector<128x128xf32>
    %cst_10 = arith.constant dense<0.000000e+00> : vector<128x128xf32>
    %15 = tpu.matmul %14, %2, %cst_10 {dimension_numbers = #tpu.dot_dimension_numbers<[1], [0], [0], [1], [0, 0, 1, 1], [], []>} : vector<128x128xf32>, vector<128x128xf32>, vector<128x128xf32> -> vector<128x128xf32>
    %c0_11 = arith.constant 0 : index
    %c0_12 = arith.constant 0 : index
    %16 = vector.load %arg5[%c0_11, %c0_12] : memref<1x128xf32, #tpu.memory_space<vmem>>, vector<1x128xf32>
    %17 = vector.broadcast %16 : vector<1x128xf32> to vector<128x128xf32>
    %18 = arith.addf %15, %17 : vector<128x128xf32>
    %c0_13 = arith.constant 0 : index
    %c0_14 = arith.constant 0 : index
    %19 = vector.load %arg6[%c0_13, %c0_14] : memref<128x128xf32, #tpu.memory_space<vmem>>, vector<128x128xf32>
    tpu.vector_store %arg6[%c0_13, %c0_14], %18 {strides = array<i32>} : memref<128x128xf32, #tpu.memory_space<vmem>>, vector<128x128xf32>,
    return
  }
  func.func @transform_0(%arg0: i32) -> (i32, i32) {
    %c0_i32 = arith.constant 0 : i32
    %c0_i32_0 = arith.constant 0 : i32
    return %arg0, %c0_i32 : i32, i32
  }
  func.func @transform_1(%arg0: i32) -> (i32, i32) {
    %c0_i32 = arith.constant 0 : i32
    %c0_i32_0 = arith.constant 0 : i32
    %c0_i32_1 = arith.constant 0 : i32
    return %c0_i32, %c0_i32_0 : i32, i32
  }
  func.func @transform_2(%arg0: i32) -> (i32, i32) {
    %c0_i32 = arith.constant 0 : i32
    %c0_i32_0 = arith.constant 0 : i32
    %c0_i32_1 = arith.constant 0 : i32
    return %c0_i32, %c0_i32_0 : i32, i32
  }
  func.func @transform_3(%arg0: i32) -> (i32, i32) {
    %c0_i32 = arith.constant 0 : i32
    %c0_i32_0 = arith.constant 0 : i32
    %c0_i32_1 = arith.constant 0 : i32
    return %c0_i32, %c0_i32_0 : i32, i32
  }
  func.func @transform_4(%arg0: i32) -> (i32, i32) {
    %c0_i32 = arith.constant 0 : i32
    %c0_i32_0 = arith.constant 0 : i32
    %c0_i32_1 = arith.constant 0 : i32
    return %c0_i32, %c0_i32_0 : i32, i32
  }
  func.func @transform_5(%arg0: i32) -> (i32, i32) {
    %c0_i32 = arith.constant 0 : i32
    %c0_i32_0 = arith.constant 0 : i32
    return %arg0, %c0_i32 : i32, i32
  }
}

module attributes {stable_mosaic.version = 11 : i64} {
  func.func @_mlp_resident_kernel(%arg0: i32, %arg1: memref<128x128xf32, #tpu.memory_space<vmem>>, %arg2: memref<128x128xf32, #tpu.memory_space<vmem>>, %arg3: memref<1x128xf32, #tpu.memory_space<vmem>>, %arg4: memref<128x128xf32, #tpu.memory_space<vmem>>, %arg5: memref<1x128xf32, #tpu.memory_space<vmem>>, %arg6: memref<128x128xf32, #tpu.memory_space<vmem>>) attributes {dimension_semantics = [#tpu.dimension_semantics<parallel>], iteration_bounds = array<i64: 1>, scalar_prefetch = 0 : i64, scratch_operands = 0 : i64, tpu.core_type = #tpu.core_type<tc>, window_params = [{transform_indices = @transform_0, window_bounds = array<i64: 128, 128>}, {pipeline_mode = #tpu.pipeline_mode<synchronous>, transform_indices = @transform_1, window_bounds = array<i64: 128, 128>}, {pipeline_mode = #tpu.pipeline_mode<synchronous>, transform_indices = @transform_2, window_bounds = array<i64: 1, 128>}, {pipeline_mode = #tpu.pipeline_mode<synchronous>, transform_indices = @transform_3, window_bounds = array<i64: 128, 128>}, {pipeline_mode = #tpu.pipeline_mode<synchronous>, transform_indices = @transform_4, window_bounds = array<i64: 1, 128>}, {transform_indices = @transform_5, window_bounds = array<i64: 128, 128>}]} {
    %c0 = arith.constant 0 : index
    %c0_0 = arith.constant 0 : index
    %0 = vector.load %arg1[%c0, %c0_0] : memref<128x128xf32, #tpu.memory_space<vmem>>, vector<128x128xf32>
    %c0_1 = arith.constant 0 : index
    %c0_2 = arith.constant 0 : index
    %1 = vector.load %arg2[%c0_1, %c0_2] : memref<128x128xf32, #tpu.memory_space<vmem>>, vector<128x128xf32>
    %c0_3 = arith.constant 0 : index
    %c0_4 = arith.constant 0 : index
    %2 = vector.load %arg4[%c0_3, %c0_4] : memref<128x128xf32, #tpu.memory_space<vmem>>, vector<128x128xf32>
    %cst = arith.constant dense<0.000000e+00> : vector<128x128xf32>
    %3 = tpu.matmul %0, %1, %cst {dimension_numbers = #tpu.dot_dimension_numbers<[1], [0], [0], [1], [0, 0, 1, 1], [], []>} : vector<128x128xf32>, vector<128x128xf32>, vector<128x128xf32> -> vector<128x128xf32>
    %c0_5 = arith.constant 0 : index
    %c0_6 = arith.constant 0 : index
    %4 = vector.load %arg3[%c0_5, %c0_6] : memref<1x128xf32, #tpu.memory_space<vmem>>, vector<1x128xf32>
    %5 = vector.broadcast %4 : vector<1x128xf32> to vector<128x128xf32>
    %6 = arith.addf %3, %5 : vector<128x128xf32>
    %cst_7 = arith.constant 5.000000e-01 : f32
    %7 = vector.broadcast %cst_7 : f32 to vector<128x128xf32>
    %8 = arith.mulf %7, %6 : vector<128x128xf32>
    %cst_8 = arith.constant 0.707106769 : f32
    %9 = vector.broadcast %cst_8 : f32 to vector<128x128xf32>
    %10 = arith.mulf %6, %9 : vector<128x128xf32>
    %11 = math.erf %10 : vector<128x128xf32>
    %cst_9 = arith.constant 1.000000e+00 : f32
    %12 = vector.broadcast %cst_9 : f32 to vector<128x128xf32>
    %13 = arith.addf %12, %11 : vector<128x128xf32>
    %14 = arith.mulf %8, %13 : vector<128x128xf32>
    %cst_10 = arith.constant dense<0.000000e+00> : vector<128x128xf32>
    %15 = tpu.matmul %14, %2, %cst_10 {dimension_numbers = #tpu.dot_dimension_numbers<[1], [0], [0], [1], [0, 0, 1, 1], [], []>} : vector<128x128xf32>, vector<128x128xf32>, vector<128x128xf32> -> vector<128x128xf32>
    %c0_11 = arith.constant 0 : index
    %c0_12 = arith.constant 0 : index
    %16 = vector.load %arg5[%c0_11, %c0_12] : memref<1x128xf32, #tpu.memory_space<vmem>>, vector<1x128xf32>
    %17 = vector.broadcast %16 : vector<1x128xf32> to vector<128x128xf32>
    %18 = arith.addf %15, %17 : vector<128x128xf32>
    %c0_13 = arith.constant 0 : index
    %c0_14 = arith.constant 0 : index
    %19 = vector.load %arg6[%c0_13, %c0_14] : memref<128x128xf32, #tpu.memory_space<vmem>>, vector<128x128xf32>
    tpu.vector_store %arg6[%c0_13, %c0_14], %18 {strides = array<i32>} : memref<128x128xf32, #tpu.memory_space<vmem>>, vector<128x128xf32>,
    return
  }
  func.func @transform_0(%arg0: i32) -> (i32, i32) {
    %c0_i32 = arith.constant 0 : i32
    %c0_i32_0 = arith.constant 0 : i32
    return %arg0, %c0_i32 : i32, i32
  }
  func.func @transform_1(%arg0: i32) -> (i32, i32) {
    %c0_i32 = arith.constant 0 : i32
    %c0_i32_0 = arith.constant 0 : i32
    %c0_i32_1 = arith.constant 0 : i32
    return %c0_i32, %c0_i32_0 : i32, i32
  }
  func.func @transform_2(%arg0: i32) -> (i32, i32) {
    %c0_i32 = arith.constant 0 : i32
    %c0_i32_0 = arith.constant 0 : i32
    %c0_i32_1 = arith.constant 0 : i32
    return %c0_i32, %c0_i32_0 : i32, i32
  }
  func.func @transform_3(%arg0: i32) -> (i32, i32) {
    %c0_i32 = arith.constant 0 : i32
    %c0_i32_0 = arith.constant 0 : i32
    %c0_i32_1 = arith.constant 0 : i32
    return %c0_i32, %c0_i32_0 : i32, i32
  }
  func.func @transform_4(%arg0: i32) -> (i32, i32) {
    %c0_i32 = arith.constant 0 : i32
    %c0_i32_0 = arith.constant 0 : i32
    %c0_i32_1 = arith.constant 0 : i32
    return %c0_i32, %c0_i32_0 : i32, i32
  }
  func.func @transform_5(%arg0: i32) -> (i32, i32) {
    %c0_i32 = arith.constant 0 : i32
    %c0_i32_0 = arith.constant 0 : i32
    return %arg0, %c0_i32 : i32, i32
  }
}

</mosaic_0001>

<llo_original>
// kernel: tpu_custom_call.1
$region0: #{tpu_custom_call.1}
  #allocation0 [shape = 'u32[]', space=smem, size = 0x4, offset = 0x4, fixed_abs, tag = 'smem constant byte address 0x4 - core index']
  #allocation1 [shape = 'u32[144,128]{1,0:T(1,128)}', space=vmem, size = 0x12000, scoped, tag = 'internal scratch']
  %s0 = inlined_call_operand.hbm [shape: f32[128,128], index: 0, kind: input, shape index: {}]
  %s1 = inlined_call_operand.hbm [shape: f32[128,128], index: 1, kind: input, shape index: {}]
  %s2 = inlined_call_operand.vmem [shape: f32[1,128], index: 2, kind: input, shape index: {}]
  %s3 = inlined_call_operand.hbm [shape: f32[128,128], index: 3, kind: input, shape index: {}]
  %s4 = inlined_call_operand.vmem [shape: f32[1,128], index: 4, kind: input, shape index: {}]
  %s5 = inlined_call_operand.hbm [shape: f32[128,128], index: 5, kind: output, shape index: {}]
  %s6 = sld [smem:[#allocation0]]
  $region42: #{tpu_custom_call.1} parent=0
    _
  %s8 = ssub.s32 1, %s6
  %s9 = scalar_select 0, %s8, %s6
  $region1: #{tpu_custom_call.1} parent=0
    #allocation2 [shape = 'u8[65536]{0}', space=vmem, size = 0x10000, scoped, tag = 'input window, operand 0, single buffered']
    #allocation3 [shape = 's32[1]{0}', space=sflag, size = 0x4, scoped, tag = 'scoped memory for tpu_custom_call.1']
    #allocation4 [shape = 's32[1]{0}', space=sflag, size = 0x4, scoped, tag = 'scoped memory for tpu_custom_call.1']
    #allocation5 [shape = 'u8[65536]{0}', space=vmem, size = 0x10000, scoped, tag = 'input window, operand 1, single buffered']
    #allocation6 [shape = 's32[1]{0}', space=sflag, size = 0x4, scoped, tag = 'scoped memory for tpu_custom_call.1']
    #allocation7 [shape = 'u8[65536]{0}', space=vmem, size = 0x10000, scoped, tag = 'input window, operand 3, single buffered']
    #allocation8 [shape = 'u8[65536]{0}', space=vmem, size = 0x10000, scoped, tag = 'output window, operand 0, single buffered']
    %10 = vsyncpa [#allocation3], 0
    %11 = vsyncpa [#allocation6], 0
    %12 = vsyncpa [#allocation4], 0
    // Predicated region
    $region2: #{tpu_custom_call.1} parent=1 // pred_check
      _
    $region3: #{tpu_custom_call.1} parent=1 // pred_check_branch
      %14 = sbr.rel (0) target = $region5
    $region4: #{tpu_custom_call.1} parent=1 // pred_region
      %s16 = ssub.s32 2048, 2048
      %17 = vsyncadd [#allocation3], %s16
      %s18 = sshll.u32 [#allocation2], 4
      %s19 = int_to_ptr.vmem [resolvable:$true] %s18
      %24 = dma.hbm_to_vmem [thread:$0]  %s0, 2048, %s19, [#allocation3], 128, 128, 8
    $region5: #{tpu_custom_call.1} parent=1 // pred_fallthru
      _
    // Predicated region
    $region6: #{tpu_custom_call.1} parent=1 // pred_check
      _
    $region7: #{tpu_custom_call.1} parent=1 // pred_check_branch
      %26 = sbr.rel (0) target = $region9
    $region8: #{tpu_custom_call.1} parent=1 // pred_region
      %s28 = ssub.s32 2048, 2048
      %29 = vsyncadd [#allocation6], %s28
      %s30 = sshll.u32 [#allocation5], 4
      %s31 = int_to_ptr.vmem [resolvable:$true] %s30
      %36 = dma.hbm_to_vmem [thread:$0]  %s1, 2048, %s31, [#allocation6], 128, 128, 8
    $region9: #{tpu_custom_call.1} parent=1 // pred_fallthru
      _
    // Predicated region
    $region10: #{tpu_custom_call.1} parent=1 // pred_check
      _
    $region11: #{tpu_custom_call.1} parent=1 // pred_check_branch
      %38 = sbr.rel (0) target = $region13
    $region12: #{tpu_custom_call.1} parent=1 // pred_region
      _
    $region13: #{tpu_custom_call.1} parent=1 // pred_fallthru
      _
    // Predicated region
    $region14: #{tpu_custom_call.1} parent=1 // pred_check
      _
    $region15: #{tpu_custom_call.1} parent=1 // pred_check_branch
      %40 = sbr.rel (0) target = $region17
    $region16: #{tpu_custom_call.1} parent=1 // pred_region
      %s42 = ssub.s32 2048, 2048
      %43 = vsyncadd [#allocation6], %s42
      %s44 = sshll.u32 [#allocation7], 4
      %s45 = int_to_ptr.vmem [resolvable:$true] %s44
      %50 = dma.hbm_to_vmem [thread:$0]  %s3, 2048, %s45, [#allocation6], 128, 128, 8
    $region17: #{tpu_custom_call.1} parent=1 // pred_fallthru
      _
    // Predicated region
    $region18: #{tpu_custom_call.1} parent=1 // pred_check
      _
    $region19: #{tpu_custom_call.1} parent=1 // pred_check_branch
      %52 = sbr.rel (0) target = $region21
    $region20: #{tpu_custom_call.1} parent=1 // pred_region
      _
    $region21: #{tpu_custom_call.1} parent=1 // pred_fallthru
      _
    // Predicated region
    $region22: #{tpu_custom_call.1} parent=1 // pred_check
      _
    $region23: #{tpu_custom_call.1} parent=1 // pred_check_branch
      %54 = sbr.rel (0) target = $region25
    $region24: #{tpu_custom_call.1} parent=1 // pred_region
      %55 = dma.done [#allocation3], 2048
    $region25: #{tpu_custom_call.1} parent=1 // pred_fallthru
      _
    // Predicated region
    $region26: #{tpu_custom_call.1} parent=1 // pred_check
      _
    $region27: #{tpu_custom_call.1} parent=1 // pred_check_branch
      %57 = sbr.rel (0) target = $region29
    $region28: #{tpu_custom_call.1} parent=1 // pred_region
      %58 = dma.done [#allocation6], 2048
    $region29: #{tpu_custom_call.1} parent=1 // pred_fallthru
      _
    // Predicated region
    $region30: #{tpu_custom_call.1} parent=1 // pred_check
      _
    $region31: #{tpu_custom_call.1} parent=1 // pred_check_branch
      %60 = sbr.rel (0) target = $region33
    $region32: #{tpu_custom_call.1} parent=1 // pred_region
      %61 = dma.done [#allocation6], 2048
    $region33: #{tpu_custom_call.1} parent=1 // pred_fallthru
      _
    %v62 = vld [vmem:[#allocation2] sm:$0xff]
    %v63 = vld [vmem:[#allocation2 + $0x8] sm:$0xff]
    %v64 = vld [vmem:[#allocation2 + $0x10] sm:$0xff]
    %v65 = vld [vmem:[#allocation2 + $0x18] sm:$0xff]
    %v66 = vld [vmem:[#allocation2 + $0x20] sm:$0xff]
    %v67 = vld [vmem:[#allocation2 + $0x28] sm:$0xff]
    %v68 = vld [vmem:[#allocation2 + $0x30] sm:$0xff]
    %v69 = vld [vmem:[#allocation2 + $0x38] sm:$0xff]
    %v70 = vld [vmem:[#allocation2 + $0x40] sm:$0xff]
    %v71 = vld [vmem:[#allocation2 + $0x48] sm:$0xff]
    %v72 = vld [vmem:[#allocation2 + $0x50] sm:$0xff]
    %v73 = vld [vmem:[#allocation2 + $0x58] sm:$0xff]
    %v74 = vld [vmem:[#allocation2 + $0x60] sm:$0xff]
    %v75 = vld [vmem:[#allocation2 + $0x68] sm:$0xff]
    %v76 = vld [vmem:[#allocation2 + $0x70] sm:$0xff]
    %v77 = vld [vmem:[#allocation2 + $0x78] sm:$0xff]
    %v78 = vld [vmem:[#allocation5] sm:$0xff]
    %v79 = vld [vmem:[#allocation5 + $0x8] sm:$0xff]
    %v80 = vld [vmem:[#allocation5 + $0x10] sm:$0xff]
    %v81 = vld [vmem:[#allocation5 + $0x18] sm:$0xff]
    %v82 = vld [vmem:[#allocation5 + $0x20] sm:$0xff]
    %v83 = vld [vmem:[#allocation5 + $0x28] sm:$0xff]
    %v84 = vld [vmem:[#allocation5 + $0x30] sm:$0xff]
    %v85 = vld [vmem:[#allocation5 + $0x38] sm:$0xff]
    %v86 = vld [vmem:[#allocation5 + $0x40] sm:$0xff]
    %v87 = vld [vmem:[#allocation5 + $0x48] sm:$0xff]
    %v88 = vld [vmem:[#allocation5 + $0x50] sm:$0xff]
    %v89 = vld [vmem:[#allocation5 + $0x58] sm:$0xff]
    %v90 = vld [vmem:[#allocation5 + $0x60] sm:$0xff]
    %v91 = vld [vmem:[#allocation5 + $0x68] sm:$0xff]
    %v92 = vld [vmem:[#allocation5 + $0x70] sm:$0xff]
    %v93 = vld [vmem:[#allocation5 + $0x78] sm:$0xff]
    %v94 = vld [vmem:[#allocation7] sm:$0xff]
    %v95 = vld [vmem:[#allocation7 + $0x8] sm:$0xff]
    %v96 = vld [vmem:[#allocation7 + $0x10] sm:$0xff]
    %v97 = vld [vmem:[#allocation7 + $0x18] sm:$0xff]
    %v98 = vld [vmem:[#allocation7 + $0x20] sm:$0xff]
    %v99 = vld [vmem:[#allocation7 + $0x28] sm:$0xff]
    %v100 = vld [vmem:[#allocation7 + $0x30] sm:$0xff]
    %v101 = vld [vmem:[#allocation7 + $0x38] sm:$0xff]
    %v102 = vld [vmem:[#allocation7 + $0x40] sm:$0xff]
    %v103 = vld [vmem:[#allocation7 + $0x48] sm:$0xff]
    %v104 = vld [vmem:[#allocation7 + $0x50] sm:$0xff]
    %v105 = vld [vmem:[#allocation7 + $0x58] sm:$0xff]
    %v106 = vld [vmem:[#allocation7 + $0x60] sm:$0xff]
    %v107 = vld [vmem:[#allocation7 + $0x68] sm:$0xff]
    %v108 = vld [vmem:[#allocation7 + $0x70] sm:$0xff]
    %v109 = vld [vmem:[#allocation7 + $0x78] sm:$0xff]
    %v110 = vld [vmem:[%s2] sm:$0x1]
    %v112 = vlaneseq
    %v113 = vshrl.u32 %v112, 7
    %v114 = vsub.s32 0, %v113
    %v115 = vrot.slane %v110, %v114
    %117 = vmatprep.subr.mxu0 0.0
    %118 = vmatpush1.msra.mxu0 %v78
    %119 = vmatprep.subr.mxu0 0.0
    %120 = vmatpush1.msra.mxu0 %v79
    %121 = vmatprep.subr.mxu0 0.0
    %122 = vmatpush1.msra.mxu0 %v80
    %123 = vmatprep.subr.mxu0 0.0
    %124 = vmatpush1.msra.mxu0 %v81
    %125 = vmatprep.subr.mxu0 0.0
    %126 = vmatpush1.msra.mxu0 %v82
    %127 = vmatprep.subr.mxu0 0.0
    %128 = vmatpush1.msra.mxu0 %v83
    %129 = vmatprep.subr.mxu0 0.0
    %130 = vmatpush1.msra.mxu0 %v84
    %131 = vmatprep.subr.mxu0 0.0
    %132 = vmatpush1.msra.mxu0 %v85
    %133 = vmatprep.subr.mxu0 0.0
    %134 = vmatpush1.msra.mxu0 %v86
    %135 = vmatprep.subr.mxu0 0.0
    %136 = vmatpush1.msra.mxu0 %v87
    %137 = vmatprep.subr.mxu0 0.0
    %138 = vmatpush1.msra.mxu0 %v88
    %139 = vmatprep.subr.mxu0 0.0
    %140 = vmatpush1.msra.mxu0 %v89
    %141 = vmatprep.subr.mxu0 0.0
    %142 = vmatpush1.msra.mxu0 %v90
    %143 = vmatprep.subr.mxu0 0.0
    %144 = vmatpush1.msra.mxu0 %v91
    %145 = vmatprep.subr.mxu0 0.0
    %146 = vmatpush1.msra.mxu0 %v92
    %147 = vmatprep.subr.mxu0 0.0
    %148 = vmatpush1.msra.mxu0 %v93
    %149 = vmatprep.subr.mxu0 0.0
    %150 = vmatpush1.msra.mxu0 0.0
    %151 = vmatprep.subr.mxu0 0.0
    %152 = vmatpush1.msra.mxu0 0.0
    %153 = vmatprep.subr.mxu0 0.0
    %154 = vmatpush1.msra.mxu0 0.0
    %155 = vmatprep.subr.mxu0 0.0
    %156 = vmatpush1.msra.mxu0 0.0
    %157 = vmatprep.subr.mxu0 0.0
    %158 = vmatpush1.msra.mxu0 0.0
    %159 = vmatprep.subr.mxu0 0.0
    %160 = vmatpush1.msra.mxu0 0.0
    %161 = vmatprep.subr.mxu0 0.0
    %162 = vmatpush1.msra.mxu0 0.0
    %163 = vmatprep.subr.mxu0 0.0
    %164 = vmatpush1.msra.mxu0 0.0
    %165 = vmatprep.subr.mxu0 0.0
    %166 = vmatpush1.msra.mxu0 0.0
    %167 = vmatprep.subr.mxu0 0.0
    %168 = vmatpush1.msra.mxu0 0.0
    %169 = vmatprep.subr.mxu0 0.0
    %170 = vmatpush1.msra.mxu0 0.0
    %171 = vmatprep.subr.mxu0 0.0
    %172 = vmatpush1.msra.mxu0 0.0
    %173 = vmatprep.subr.mxu0 0.0
    %174 = vmatpush1.msra.mxu0 0.0
    %175 = vmatprep.subr.mxu0 0.0
    %176 = vmatpush1.msra.mxu0 0.0
    %177 = vmatprep.subr.mxu0 0.0
    %178 = vmatpush1.msra.mxu0 0.0
    %179 = vmatprep.subr.mxu0 0.0
    %180 = vmatpush1.msra.mxu0 0.0
    %181 = vmatprep.mubr.f32.mxu0 0.0
    %182 = vmatmul.mubr.f32.gmra.mrb[0].mxu0 %v62
    %v183 = vpop.f32.mrb[0].mxu0
    %v184 = vadd.f32 %v115, %v183
    %v185 = vpop.f32.mrb[0].mxu0
    %186 = vmatprep.mubr.f32.mxu0 0.0
    %187 = vmatmul.mubr.f32.gmra.mrb[0].mxu0 %v63
    %v188 = vpop.f32.mrb[0].mxu0
    %v189 = vadd.f32 %v115, %v188
    %v190 = vpop.f32.mrb[0].mxu0
    %191 = vmatprep.mubr.f32.mxu0 0.0
    %192 = vmatmul.mubr.f32.gmra.mrb[0].mxu0 %v64
    %v193 = vpop.f32.mrb[0].mxu0
    %v194 = vadd.f32 %v115, %v193
    %v195 = vpop.f32.mrb[0].mxu0
    %196 = vmatprep.mubr.f32.mxu0 0.0
    %197 = vmatmul.mubr.f32.gmra.mrb[0].mxu0 %v65
    %v198 = vpop.f32.mrb[0].mxu0
    %v199 = vadd.f32 %v115, %v198
    %v200 = vpop.f32.mrb[0].mxu0
    %201 = vmatprep.mubr.f32.mxu0 0.0
    %202 = vmatmul.mubr.f32.gmra.mrb[0].mxu0 %v66
    %v203 = vpop.f32.mrb[0].mxu0
    %v204 = vadd.f32 %v115, %v203
    %v205 = vpop.f32.mrb[0].mxu0
    %206 = vmatprep.mubr.f32.mxu0 0.0
    %207 = vmatmul.mubr.f32.gmra.mrb[0].mxu0 %v67
    %v208 = vpop.f32.mrb[0].mxu0
    %v209 = vadd.f32 %v115, %v208
    %v210 = vpop.f32.mrb[0].mxu0
    %211 = vmatprep.mubr.f32.mxu0 0.0
    %212 = vmatmul.mubr.f32.gmra.mrb[0].mxu0 %v68
    %v213 = vpop.f32.mrb[0].mxu0
    %v214 = vadd.f32 %v115, %v213
    %v215 = vpop.f32.mrb[0].mxu0
    %216 = vmatprep.mubr.f32.mxu0 0.0
    %217 = vmatmul.mubr.f32.gmra.mrb[0].mxu0 %v69
    %v218 = vpop.f32.mrb[0].mxu0
    %v219 = vadd.f32 %v115, %v218
    %v220 = vpop.f32.mrb[0].mxu0
    %221 = vmatprep.mubr.f32.mxu0 0.0
    %222 = vmatmul.mubr.f32.gmra.mrb[0].mxu0 %v70
    %v223 = vpop.f32.mrb[0].mxu0
    %v224 = vadd.f32 %v115, %v223
    %v225 = vpop.f32.mrb[0].mxu0
    %226 = vmatprep.mubr.f32.mxu0 0.0
    %227 = vmatmul.mubr.f32.gmra.mrb[0].mxu0 %v71
    %v228 = vpop.f32.mrb[0].mxu0
    %v229 = vadd.f32 %v115, %v228
    %v230 = vpop.f32.mrb[0].mxu0
    %231 = vmatprep.mubr.f32.mxu0 0.0
    %232 = vmatmul.mubr.f32.gmra.mrb[0].mxu0 %v72
    %v233 = vpop.f32.mrb[0].mxu0
    %v234 = vadd.f32 %v115, %v233
    %v235 = vpop.f32.mrb[0].mxu0
    %236 = vmatprep.mubr.f32.mxu0 0.0
    %237 = vmatmul.mubr.f32.gmra.mrb[0].mxu0 %v73
    %v238 = vpop.f32.mrb[0].mxu0
    %v239 = vadd.f32 %v115, %v238
    %v240 = vpop.f32.mrb[0].mxu0
    %241 = vmatprep.mubr.f32.mxu0 0.0
    %242 = vmatmul.mubr.f32.gmra.mrb[0].mxu0 %v74
    %v243 = vpop.f32.mrb[0].mxu0
    %v244 = vadd.f32 %v115, %v243
    %v245 = vpop.f32.mrb[0].mxu0
    %246 = vmatprep.mubr.f32.mxu0 0.0
    %247 = vmatmul.mubr.f32.gmra.mrb[0].mxu0 %v75
    %v248 = vpop.f32.mrb[0].mxu0
    %v249 = vadd.f32 %v115, %v248
    %v250 = vpop.f32.mrb[0].mxu0
    %251 = vmatprep.mubr.f32.mxu0 0.0
    %252 = vmatmul.mubr.f32.gmra.mrb[0].mxu0 %v76
    %v253 = vpop.f32.mrb[0].mxu0
    %v254 = vadd.f32 %v115, %v253
    %v255 = vpop.f32.mrb[0].mxu0
    %256 = vmatprep.mubr.f32.mxu0 0.0
    %257 = vmatmul.mubr.f32.gmra.mrb[0].mxu0 %v77
    %v258 = vpop.f32.mrb[0].mxu0
    %v259 = vadd.f32 %v115, %v258
    %v260 = vpop.f32.mrb[0].mxu0
    %261 = vdwg.mxu0
    %v262 = vmul.f32 %v184, 0.5
    %v263 = vmul.f32 %v189, 0.5
    %v264 = vmul.f32 %v194, 0.5
    %v265 = vmul.f32 %v199, 0.5
    %v266 = vmul.f32 %v204, 0.5
    %v267 = vmul.f32 %v209, 0.5
    %v268 = vmul.f32 %v214, 0.5
    %v269 = vmul.f32 %v219, 0.5
    %v270 = vmul.f32 %v224, 0.5
    %v271 = vmul.f32 %v229, 0.5
    %v272 = vmul.f32 %v234, 0.5
    %v273 = vmul.f32 %v239, 0.5
    %v274 = vmul.f32 %v244, 0.5
    %v275 = vmul.f32 %v249, 0.5
    %v276 = vmul.f32 %v254, 0.5
    %v277 = vmul.f32 %v259, 0.5
    %v278 = vmul.f32 %v184, 0.70710677
    %v279 = vmul.f32 %v189, 0.70710677
    %v280 = vmul.f32 %v194, 0.70710677
    %v281 = vmul.f32 %v199, 0.70710677
    %v282 = vmul.f32 %v204, 0.70710677
    %v283 = vmul.f32 %v209, 0.70710677
    %v284 = vmul.f32 %v214, 0.70710677
    %v285 = vmul.f32 %v219, 0.70710677
    %v286 = vmul.f32 %v224, 0.70710677
    %v287 = vmul.f32 %v229, 0.70710677
    %v288 = vmul.f32 %v234, 0.70710677
    %v289 = vmul.f32 %v239, 0.70710677
    %v290 = vmul.f32 %v244, 0.70710677
    %v291 = vmul.f32 %v249, 0.70710677
    %v292 = vmul.f32 %v254, 0.70710677
    %v293 = vmul.f32 %v259, 0.70710677
    %v294 = verf.f32.pop %v278
    %v295 = verf.f32.pop %v279
    %v296 = verf.f32.pop %v280
    %v297 = verf.f32.pop %v281
    %v298 = verf.f32.pop %v282
    %v299 = verf.f32.pop %v283
    %v300 = verf.f32.pop %v284
    %v301 = verf.f32.pop %v285
    %v302 = verf.f32.pop %v286
    %v303 = verf.f32.pop %v287
    %v304 = verf.f32.pop %v288
    %v305 = verf.f32.pop %v289
    %v306 = verf.f32.pop %v290
    %v307 = verf.f32.pop %v291
    %v308 = verf.f32.pop %v292
    %v309 = verf.f32.pop %v293
    %v310 = vadd.f32 %v294, 1.0
    %v311 = vadd.f32 %v295, 1.0
    %v312 = vadd.f32 %v296, 1.0
    %v313 = vadd.f32 %v297, 1.0
    %v314 = vadd.f32 %v298, 1.0
    %v315 = vadd.f32 %v299, 1.0
    %v316 = vadd.f32 %v300, 1.0
    %v317 = vadd.f32 %v301, 1.0
    %v318 = vadd.f32 %v302, 1.0
    %v319 = vadd.f32 %v303, 1.0
    %v320 = vadd.f32 %v304, 1.0
    %v321 = vadd.f32 %v305, 1.0
    %v322 = vadd.f32 %v306, 1.0
    %v323 = vadd.f32 %v307, 1.0
    %v324 = vadd.f32 %v308, 1.0
    %v325 = vadd.f32 %v309, 1.0
    %v326 = vmul.f32 %v262, %v310
    %v327 = vmul.f32 %v263, %v311
    %v328 = vmul.f32 %v264, %v312
    %v329 = vmul.f32 %v265, %v313
    %v330 = vmul.f32 %v266, %v314
    %v331 = vmul.f32 %v267, %v315
    %v332 = vmul.f32 %v268, %v316
    %v333 = vmul.f32 %v269, %v317
    %v334 = vmul.f32 %v270, %v318
    %v335 = vmul.f32 %v271, %v319
    %v336 = vmul.f32 %v272, %v320
    %v337 = vmul.f32 %v273, %v321
    %v338 = vmul.f32 %v274, %v322
    %v339 = vmul.f32 %v275, %v323
    %v340 = vmul.f32 %v276, %v324
    %v341 = vmul.f32 %v277, %v325
    %v342 = vld [vmem:[%s4] sm:$0x1]
    %v344 = vlaneseq
    %v345 = vshrl.u32 %v344, 7
    %v346 = vsub.s32 0, %v345
    %v347 = vrot.slane %v342, %v346
    %349 = vmatprep.subr.mxu0 0.0
    %350 = vmatpush1.msra.mxu0 %v94
    %351 = vmatprep.subr.mxu0 0.0
    %352 = vmatpush1.msra.mxu0 %v95
    %353 = vmatprep.subr.mxu0 0.0
    %354 = vmatpush1.msra.mxu0 %v96
    %355 = vmatprep.subr.mxu0 0.0
    %356 = vmatpush1.msra.mxu0 %v97
    %357 = vmatprep.subr.mxu0 0.0
    %358 = vmatpush1.msra.mxu0 %v98
    %359 = vmatprep.subr.mxu0 0.0
    %360 = vmatpush1.msra.mxu0 %v99
    %361 = vmatprep.subr.mxu0 0.0
    %362 = vmatpush1.msra.mxu0 %v100
    %363 = vmatprep.subr.mxu0 0.0
    %364 = vmatpush1.msra.mxu0 %v101
    %365 = vmatprep.subr.mxu0 0.0
    %366 = vmatpush1.msra.mxu0 %v102
    %367 = vmatprep.subr.mxu0 0.0
    %368 = vmatpush1.msra.mxu0 %v103
    %369 = vmatprep.subr.mxu0 0.0
    %370 = vmatpush1.msra.mxu0 %v104
    %371 = vmatprep.subr.mxu0 0.0
    %372 = vmatpush1.msra.mxu0 %v105
    %373 = vmatprep.subr.mxu0 0.0
    %374 = vmatpush1.msra.mxu0 %v106
    %375 = vmatprep.subr.mxu0 0.0
    %376 = vmatpush1.msra.mxu0 %v107
    %377 = vmatprep.subr.mxu0 0.0
    %378 = vmatpush1.msra.mxu0 %v108
    %379 = vmatprep.subr.mxu0 0.0
    %380 = vmatpush1.msra.mxu0 %v109
    %381 = vmatprep.subr.mxu0 0.0
    %382 = vmatpush1.msra.mxu0 0.0
    %383 = vmatprep.subr.mxu0 0.0
    %384 = vmatpush1.msra.mxu0 0.0
    %385 = vmatprep.subr.mxu0 0.0
    %386 = vmatpush1.msra.mxu0 0.0
    %387 = vmatprep.subr.mxu0 0.0
    %388 = vmatpush1.msra.mxu0 0.0
    %389 = vmatprep.subr.mxu0 0.0
    %390 = vmatpush1.msra.mxu0 0.0
    %391 = vmatprep.subr.mxu0 0.0
    %392 = vmatpush1.msra.mxu0 0.0
    %393 = vmatprep.subr.mxu0 0.0
    %394 = vmatpush1.msra.mxu0 0.0
    %395 = vmatprep.subr.mxu0 0.0
    %396 = vmatpush1.msra.mxu0 0.0
    %397 = vmatprep.subr.mxu0 0.0
    %398 = vmatpush1.msra.mxu0 0.0
    %399 = vmatprep.subr.mxu0 0.0
    %400 = vmatpush1.msra.mxu0 0.0
    %401 = vmatprep.subr.mxu0 0.0
    %402 = vmatpush1.msra.mxu0 0.0
    %403 = vmatprep.subr.mxu0 0.0
    %404 = vmatpush1.msra.mxu0 0.0
    %405 = vmatprep.subr.mxu0 0.0
    %406 = vmatpush1.msra.mxu0 0.0
    %407 = vmatprep.subr.mxu0 0.0
    %408 = vmatpush1.msra.mxu0 0.0
    %409 = vmatprep.subr.mxu0 0.0
    %410 = vmatpush1.msra.mxu0 0.0
    %411 = vmatprep.subr.mxu0 0.0
    %412 = vmatpush1.msra.mxu0 0.0
    %413 = vmatprep.mubr.f32.mxu0 0.0
    %414 = vmatmul.mubr.f32.gmra.mrb[0].mxu0 %v326
    %v415 = vpop.f32.mrb[0].mxu0
    %v416 = vadd.f32 %v347, %v415
    %v417 = vpop.f32.mrb[0].mxu0
    %418 = vmatprep.mubr.f32.mxu0 0.0
    %419 = vmatmul.mubr.f32.gmra.mrb[0].mxu0 %v327
    %v420 = vpop.f32.mrb[0].mxu0
    %v421 = vadd.f32 %v347, %v420
    %v422 = vpop.f32.mrb[0].mxu0
    %423 = vmatprep.mubr.f32.mxu0 0.0
    %424 = vmatmul.mubr.f32.gmra.mrb[0].mxu0 %v328
    %v425 = vpop.f32.mrb[0].mxu0
    %v426 = vadd.f32 %v347, %v425
    %v427 = vpop.f32.mrb[0].mxu0
    %428 = vmatprep.mubr.f32.mxu0 0.0
    %429 = vmatmul.mubr.f32.gmra.mrb[0].mxu0 %v329
    %v430 = vpop.f32.mrb[0].mxu0
    %v431 = vadd.f32 %v347, %v430
    %v432 = vpop.f32.mrb[0].mxu0
    %433 = vmatprep.mubr.f32.mxu0 0.0
    %434 = vmatmul.mubr.f32.gmra.mrb[0].mxu0 %v330
    %v435 = vpop.f32.mrb[0].mxu0
    %v436 = vadd.f32 %v347, %v435
    %v437 = vpop.f32.mrb[0].mxu0
    %438 = vmatprep.mubr.f32.mxu0 0.0
    %439 = vmatmul.mubr.f32.gmra.mrb[0].mxu0 %v331
    %v440 = vpop.f32.mrb[0].mxu0
    %v441 = vadd.f32 %v347, %v440
    %v442 = vpop.f32.mrb[0].mxu0
    %443 = vmatprep.mubr.f32.mxu0 0.0
    %444 = vmatmul.mubr.f32.gmra.mrb[0].mxu0 %v332
    %v445 = vpop.f32.mrb[0].mxu0
    %v446 = vadd.f32 %v347, %v445
    %v447 = vpop.f32.mrb[0].mxu0
    %448 = vmatprep.mubr.f32.mxu0 0.0
    %449 = vmatmul.mubr.f32.gmra.mrb[0].mxu0 %v333
    %v450 = vpop.f32.mrb[0].mxu0
    %v451 = vadd.f32 %v347, %v450
    %v452 = vpop.f32.mrb[0].mxu0
    %453 = vmatprep.mubr.f32.mxu0 0.0
    %454 = vmatmul.mubr.f32.gmra.mrb[0].mxu0 %v334
    %v455 = vpop.f32.mrb[0].mxu0
    %v456 = vadd.f32 %v347, %v455
    %v457 = vpop.f32.mrb[0].mxu0
    %458 = vmatprep.mubr.f32.mxu0 0.0
    %459 = vmatmul.mubr.f32.gmra.mrb[0].mxu0 %v335
    %v460 = vpop.f32.mrb[0].mxu0
    %v461 = vadd.f32 %v347, %v460
    %v462 = vpop.f32.mrb[0].mxu0
    %463 = vmatprep.mubr.f32.mxu0 0.0
    %464 = vmatmul.mubr.f32.gmra.mrb[0].mxu0 %v336
    %v465 = vpop.f32.mrb[0].mxu0
    %v466 = vadd.f32 %v347, %v465
    %v467 = vpop.f32.mrb[0].mxu0
    %468 = vmatprep.mubr.f32.mxu0 0.0
    %469 = vmatmul.mubr.f32.gmra.mrb[0].mxu0 %v337
    %v470 = vpop.f32.mrb[0].mxu0
    %v471 = vadd.f32 %v347, %v470
    %v472 = vpop.f32.mrb[0].mxu0
    %473 = vmatprep.mubr.f32.mxu0 0.0
    %474 = vmatmul.mubr.f32.gmra.mrb[0].mxu0 %v338
    %v475 = vpop.f32.mrb[0].mxu0
    %v476 = vadd.f32 %v347, %v475
    %v477 = vpop.f32.mrb[0].mxu0
    %478 = vmatprep.mubr.f32.mxu0 0.0
    %479 = vmatmul.mubr.f32.gmra.mrb[0].mxu0 %v339
    %v480 = vpop.f32.mrb[0].mxu0
    %v481 = vadd.f32 %v347, %v480
    %v482 = vpop.f32.mrb[0].mxu0
    %483 = vmatprep.mubr.f32.mxu0 0.0
    %484 = vmatmul.mubr.f32.gmra.mrb[0].mxu0 %v340
    %v485 = vpop.f32.mrb[0].mxu0
    %v486 = vadd.f32 %v347, %v485
    %v487 = vpop.f32.mrb[0].mxu0
    %488 = vmatprep.mubr.f32.mxu0 0.0
    %489 = vmatmul.mubr.f32.gmra.mrb[0].mxu0 %v341
    %v490 = vpop.f32.mrb[0].mxu0
    %v491 = vadd.f32 %v347, %v490
    %v492 = vpop.f32.mrb[0].mxu0
    %493 = vdwg.mxu0
    %494 = vst [vmem:[#allocation8] sm:$0xff] %v416
    %495 = vst [vmem:[#allocation8 + $0x8] sm:$0xff] %v421
    %496 = vst [vmem:[#allocation8 + $0x10] sm:$0xff] %v426
    %497 = vst [vmem:[#allocation8 + $0x18] sm:$0xff] %v431
    %498 = vst [vmem:[#allocation8 + $0x20] sm:$0xff] %v436
    %499 = vst [vmem:[#allocation8 + $0x28] sm:$0xff] %v441
    %500 = vst [vmem:[#allocation8 + $0x30] sm:$0xff] %v446
    %501 = vst [vmem:[#allocation8 + $0x38] sm:$0xff] %v451
    %502 = vst [vmem:[#allocation8 + $0x40] sm:$0xff] %v456
    %503 = vst [vmem:[#allocation8 + $0x48] sm:$0xff] %v461
    %504 = vst [vmem:[#allocation8 + $0x50] sm:$0xff] %v466
    %505 = vst [vmem:[#allocation8 + $0x58] sm:$0xff] %v471
    %506 = vst [vmem:[#allocation8 + $0x60] sm:$0xff] %v476
    %507 = vst [vmem:[#allocation8 + $0x68] sm:$0xff] %v481
    %508 = vst [vmem:[#allocation8 + $0x70] sm:$0xff] %v486
    %509 = vst [vmem:[#allocation8 + $0x78] sm:$0xff] %v491
    // Predicated region
    $region34: #{tpu_custom_call.1} parent=1 // pred_check
      _
    $region35: #{tpu_custom_call.1} parent=1 // pred_check_branch
      %511 = sbr.rel (0) target = $region37
    $region36: #{tpu_custom_call.1} parent=1 // pred_region
      %s513 = ssub.s32 2048, 2048
      %514 = vsyncadd [#allocation4], %s513
      %s515 = sshll.u32 [#allocation8], 4
      %s516 = int_to_ptr.vmem [resolvable:$true] %s515
      %521 = dma.vmem_to_hbm [thread:$0]  %s516, 2048, %s5, [#allocation4], 128, 128, 8
    $region37: #{tpu_custom_call.1} parent=1 // pred_fallthru
      _
    // Predicated region
    $region38: #{tpu_custom_call.1} parent=1 // pred_check
      _
    $region39: #{tpu_custom_call.1} parent=1 // pred_check_branch
      %523 = sbr.rel (0) target = $region41
    $region40: #{tpu_custom_call.1} parent=1 // pred_region
      %524 = dma.done [#allocation4], 2048
    $region41: #{tpu_custom_call.1} parent=1 // pred_fallthru
      _
    %525 = vsyncpa [#allocation3], 1
    %526 = vsyncpa [#allocation6], 1
    %527 = vsyncpa [#allocation4], 1

// kernel: tpu_custom_call.1
$region0: #{tpu_custom_call.1}
  #allocation0 [shape = 'u32[]', space=smem, size = 0x4, offset = 0x4, fixed_abs, tag = 'smem constant byte address 0x4 - core index']
  #allocation1 [shape = 'u32[144,128]{1,0:T(1,128)}', space=vmem, size = 0x12000, scoped, tag = 'internal scratch']
  %s0 = inlined_call_operand.hbm [shape: f32[128,128], index: 0, kind: input, shape index: {}]
  %s1 = inlined_call_operand.hbm [shape: f32[128,128], index: 1, kind: input, shape index: {}]
  %s2 = inlined_call_operand.vmem [shape: f32[1,128], index: 2, kind: input, shape index: {}]
  %s3 = inlined_call_operand.hbm [shape: f32[128,128], index: 3, kind: input, shape index: {}]
  %s4 = inlined_call_operand.vmem [shape: f32[1,128], index: 4, kind: input, shape index: {}]
  %s5 = inlined_call_operand.hbm [shape: f32[128,128], index: 5, kind: output, shape index: {}]
  %s6 = sld [smem:[#allocation0]]
  $region42: #{tpu_custom_call.1} parent=0
    _
  %s8 = ssub.s32 1, %s6
  %s9 = scalar_select 0, %s8, %s6
  $region1: #{tpu_custom_call.1} parent=0
    #allocation2 [shape = 'u8[65536]{0}', space=vmem, size = 0x10000, scoped, tag = 'input window, operand 0, single buffered']
    #allocation3 [shape = 's32[1]{0}', space=sflag, size = 0x4, scoped, tag = 'scoped memory for tpu_custom_call.1']
    #allocation4 [shape = 's32[1]{0}', space=sflag, size = 0x4, scoped, tag = 'scoped memory for tpu_custom_call.1']
    #allocation5 [shape = 'u8[65536]{0}', space=vmem, size = 0x10000, scoped, tag = 'input window, operand 1, single buffered']
    #allocation6 [shape = 's32[1]{0}', space=sflag, size = 0x4, scoped, tag = 'scoped memory for tpu_custom_call.1']
    #allocation7 [shape = 'u8[65536]{0}', space=vmem, size = 0x10000, scoped, tag = 'input window, operand 3, single buffered']
    #allocation8 [shape = 'u8[65536]{0}', space=vmem, size = 0x10000, scoped, tag = 'output window, operand 0, single buffered']
    %10 = vsyncpa [#allocation3], 0
    %11 = vsyncpa [#allocation6], 0
    %12 = vsyncpa [#allocation4], 0
    // Predicated region
    $region2: #{tpu_custom_call.1} parent=1 // pred_check
      _
    $region3: #{tpu_custom_call.1} parent=1 // pred_check_branch
      %14 = sbr.rel (0) target = $region5
    $region4: #{tpu_custom_call.1} parent=1 // pred_region
      %s16 = ssub.s32 2048, 2048
      %17 = vsyncadd [#allocation3], %s16
      %s18 = sshll.u32 [#allocation2], 4
      %s19 = int_to_ptr.vmem [resolvable:$true] %s18
      %24 = dma.hbm_to_vmem [thread:$0]  %s0, 2048, %s19, [#allocation3], 128, 128, 8
    $region5: #{tpu_custom_call.1} parent=1 // pred_fallthru
      _
    // Predicated region
    $region6: #{tpu_custom_call.1} parent=1 // pred_check
      _
    $region7: #{tpu_custom_call.1} parent=1 // pred_check_branch
      %26 = sbr.rel (0) target = $region9
    $region8: #{tpu_custom_call.1} parent=1 // pred_region
      %s28 = ssub.s32 2048, 2048
      %29 = vsyncadd [#allocation6], %s28
      %s30 = sshll.u32 [#allocation5], 4
      %s31 = int_to_ptr.vmem [resolvable:$true] %s30
      %36 = dma.hbm_to_vmem [thread:$0]  %s1, 2048, %s31, [#allocation6], 128, 128, 8
    $region9: #{tpu_custom_call.1} parent=1 // pred_fallthru
      _
    // Predicated region
    $region10: #{tpu_custom_call.1} parent=1 // pred_check
      _
    $region11: #{tpu_custom_call.1} parent=1 // pred_check_branch
      %38 = sbr.rel (0) target = $region13
    $region12: #{tpu_custom_call.1} parent=1 // pred_region
      _
    $region13: #{tpu_custom_call.1} parent=1 // pred_fallthru
      _
    // Predicated region
    $region14: #{tpu_custom_call.1} parent=1 // pred_check
      _
    $region15: #{tpu_custom_call.1} parent=1 // pred_check_branch
      %40 = sbr.rel (0) target = $region17
    $region16: #{tpu_custom_call.1} parent=1 // pred_region
      %s42 = ssub.s32 2048, 2048
      %43 = vsyncadd [#allocation6], %s42
      %s44 = sshll.u32 [#allocation7], 4
      %s45 = int_to_ptr.vmem [resolvable:$true] %s44
      %50 = dma.hbm_to_vmem [thread:$0]  %s3, 2048, %s45, [#allocation6], 128, 128, 8
    $region17: #{tpu_custom_call.1} parent=1 // pred_fallthru
      _
    // Predicated region
    $region18: #{tpu_custom_call.1} parent=1 // pred_check
      _
    $region19: #{tpu_custom_call.1} parent=1 // pred_check_branch
      %52 = sbr.rel (0) target = $region21
    $region20: #{tpu_custom_call.1} parent=1 // pred_region
      _
    $region21: #{tpu_custom_call.1} parent=1 // pred_fallthru
      _
    // Predicated region
    $region22: #{tpu_custom_call.1} parent=1 // pred_check
      _
    $region23: #{tpu_custom_call.1} parent=1 // pred_check_branch
      %54 = sbr.rel (0) target = $region25
    $region24: #{tpu_custom_call.1} parent=1 // pred_region
      %55 = dma.done [#allocation3], 2048
    $region25: #{tpu_custom_call.1} parent=1 // pred_fallthru
      _
    // Predicated region
    $region26: #{tpu_custom_call.1} parent=1 // pred_check
      _
    $region27: #{tpu_custom_call.1} parent=1 // pred_check_branch
      %57 = sbr.rel (0) target = $region29
    $region28: #{tpu_custom_call.1} parent=1 // pred_region
      %58 = dma.done [#allocation6], 2048
    $region29: #{tpu_custom_call.1} parent=1 // pred_fallthru
      _
    // Predicated region
    $region30: #{tpu_custom_call.1} parent=1 // pred_check
      _
    $region31: #{tpu_custom_call.1} parent=1 // pred_check_branch
      %60 = sbr.rel (0) target = $region33
    $region32: #{tpu_custom_call.1} parent=1 // pred_region
      %61 = dma.done [#allocation6], 2048
    $region33: #{tpu_custom_call.1} parent=1 // pred_fallthru
      _
    %v62 = vld [vmem:[#allocation2] sm:$0xff]
    %v63 = vld [vmem:[#allocation2 + $0x8] sm:$0xff]
    %v64 = vld [vmem:[#allocation2 + $0x10] sm:$0xff]
    %v65 = vld [vmem:[#allocation2 + $0x18] sm:$0xff]
    %v66 = vld [vmem:[#allocation2 + $0x20] sm:$0xff]
    %v67 = vld [vmem:[#allocation2 + $0x28] sm:$0xff]
    %v68 = vld [vmem:[#allocation2 + $0x30] sm:$0xff]
    %v69 = vld [vmem:[#allocation2 + $0x38] sm:$0xff]
    %v70 = vld [vmem:[#allocation2 + $0x40] sm:$0xff]
    %v71 = vld [vmem:[#allocation2 + $0x48] sm:$0xff]
    %v72 = vld [vmem:[#allocation2 + $0x50] sm:$0xff]
    %v73 = vld [vmem:[#allocation2 + $0x58] sm:$0xff]
    %v74 = vld [vmem:[#allocation2 + $0x60] sm:$0xff]
    %v75 = vld [vmem:[#allocation2 + $0x68] sm:$0xff]
    %v76 = vld [vmem:[#allocation2 + $0x70] sm:$0xff]
    %v77 = vld [vmem:[#allocation2 + $0x78] sm:$0xff]
    %v78 = vld [vmem:[#allocation5] sm:$0xff]
    %v79 = vld [vmem:[#allocation5 + $0x8] sm:$0xff]
    %v80 = vld [vmem:[#allocation5 + $0x10] sm:$0xff]
    %v81 = vld [vmem:[#allocation5 + $0x18] sm:$0xff]
    %v82 = vld [vmem:[#allocation5 + $0x20] sm:$0xff]
    %v83 = vld [vmem:[#allocation5 + $0x28] sm:$0xff]
    %v84 = vld [vmem:[#allocation5 + $0x30] sm:$0xff]
    %v85 = vld [vmem:[#allocation5 + $0x38] sm:$0xff]
    %v86 = vld [vmem:[#allocation5 + $0x40] sm:$0xff]
    %v87 = vld [vmem:[#allocation5 + $0x48] sm:$0xff]
    %v88 = vld [vmem:[#allocation5 + $0x50] sm:$0xff]
    %v89 = vld [vmem:[#allocation5 + $0x58] sm:$0xff]
    %v90 = vld [vmem:[#allocation5 + $0x60] sm:$0xff]
    %v91 = vld [vmem:[#allocation5 + $0x68] sm:$0xff]
    %v92 = vld [vmem:[#allocation5 + $0x70] sm:$0xff]
    %v93 = vld [vmem:[#allocation5 + $0x78] sm:$0xff]
    %v94 = vld [vmem:[#allocation7] sm:$0xff]
    %v95 = vld [vmem:[#allocation7 + $0x8] sm:$0xff]
    %v96 = vld [vmem:[#allocation7 + $0x10] sm:$0xff]
    %v97 = vld [vmem:[#allocation7 + $0x18] sm:$0xff]
    %v98 = vld [vmem:[#allocation7 + $0x20] sm:$0xff]
    %v99 = vld [vmem:[#allocation7 + $0x28] sm:$0xff]
    %v100 = vld [vmem:[#allocation7 + $0x30] sm:$0xff]
    %v101 = vld [vmem:[#allocation7 + $0x38] sm:$0xff]
    %v102 = vld [vmem:[#allocation7 + $0x40] sm:$0xff]
    %v103 = vld [vmem:[#allocation7 + $0x48] sm:$0xff]
    %v104 = vld [vmem:[#allocation7 + $0x50] sm:$0xff]
    %v105 = vld [vmem:[#allocation7 + $0x58] sm:$0xff]
    %v106 = vld [vmem:[#allocation7 + $0x60] sm:$0xff]
    %v107 = vld [vmem:[#allocation7 + $0x68] sm:$0xff]
    %v108 = vld [vmem:[#allocation7 + $0x70] sm:$0xff]
    %v109 = vld [vmem:[#allocation7 + $0x78] sm:$0xff]
    %v110 = vld [vmem:[%s2] sm:$0x1]
    %v112 = vlaneseq
    %v113 = vshrl.u32 %v112, 7
    %v114 = vsub.s32 0, %v113
    %v115 = vrot.slane %v110, %v114
    %117 = vmatprep.subr.mxu0 0.0
    %118 = vmatpush1.msra.mxu0 %v78
    %119 = vmatprep.subr.mxu0 0.0
    %120 = vmatpush1.msra.mxu0 %v79
    %121 = vmatprep.subr.mxu0 0.0
    %122 = vmatpush1.msra.mxu0 %v80
    %123 = vmatprep.subr.mxu0 0.0
    %124 = vmatpush1.msra.mxu0 %v81
    %125 = vmatprep.subr.mxu0 0.0
    %126 = vmatpush1.msra.mxu0 %v82
    %127 = vmatprep.subr.mxu0 0.0
    %128 = vmatpush1.msra.mxu0 %v83
    %129 = vmatprep.subr.mxu0 0.0
    %130 = vmatpush1.msra.mxu0 %v84
    %131 = vmatprep.subr.mxu0 0.0
    %132 = vmatpush1.msra.mxu0 %v85
    %133 = vmatprep.subr.mxu0 0.0
    %134 = vmatpush1.msra.mxu0 %v86
    %135 = vmatprep.subr.mxu0 0.0
    %136 = vmatpush1.msra.mxu0 %v87
    %137 = vmatprep.subr.mxu0 0.0
    %138 = vmatpush1.msra.mxu0 %v88
    %139 = vmatprep.subr.mxu0 0.0
    %140 = vmatpush1.msra.mxu0 %v89
    %141 = vmatprep.subr.mxu0 0.0
    %142 = vmatpush1.msra.mxu0 %v90
    %143 = vmatprep.subr.mxu0 0.0
    %144 = vmatpush1.msra.mxu0 %v91
    %145 = vmatprep.subr.mxu0 0.0
    %146 = vmatpush1.msra.mxu0 %v92
    %147 = vmatprep.subr.mxu0 0.0
    %148 = vmatpush1.msra.mxu0 %v93
    %149 = vmatprep.subr.mxu0 0.0
    %150 = vmatpush1.msra.mxu0 0.0
    %151 = vmatprep.subr.mxu0 0.0
    %152 = vmatpush1.msra.mxu0 0.0
    %153 = vmatprep.subr.mxu0 0.0
    %154 = vmatpush1.msra.mxu0 0.0
    %155 = vmatprep.subr.mxu0 0.0
    %156 = vmatpush1.msra.mxu0 0.0
    %157 = vmatprep.subr.mxu0 0.0
    %158 = vmatpush1.msra.mxu0 0.0
    %159 = vmatprep.subr.mxu0 0.0
    %160 = vmatpush1.msra.mxu0 0.0
    %161 = vmatprep.subr.mxu0 0.0
    %162 = vmatpush1.msra.mxu0 0.0
    %163 = vmatprep.subr.mxu0 0.0
    %164 = vmatpush1.msra.mxu0 0.0
    %165 = vmatprep.subr.mxu0 0.0
    %166 = vmatpush1.msra.mxu0 0.0
    %167 = vmatprep.subr.mxu0 0.0
    %168 = vmatpush1.msra.mxu0 0.0
    %169 = vmatprep.subr.mxu0 0.0
    %170 = vmatpush1.msra.mxu0 0.0
    %171 = vmatprep.subr.mxu0 0.0
    %172 = vmatpush1.msra.mxu0 0.0
    %173 = vmatprep.subr.mxu0 0.0
    %174 = vmatpush1.msra.mxu0 0.0
    %175 = vmatprep.subr.mxu0 0.0
    %176 = vmatpush1.msra.mxu0 0.0
    %177 = vmatprep.subr.mxu0 0.0
    %178 = vmatpush1.msra.mxu0 0.0
    %179 = vmatprep.subr.mxu0 0.0
    %180 = vmatpush1.msra.mxu0 0.0
    %181 = vmatprep.mubr.f32.mxu0 0.0
    %182 = vmatmul.mubr.f32.gmra.mrb[0].mxu0 %v62
    %v183 = vpop.f32.mrb[0].mxu0
    %v184 = vadd.f32 %v115, %v183
    %v185 = vpop.f32.mrb[0].mxu0
    %186 = vmatprep.mubr.f32.mxu0 0.0
    %187 = vmatmul.mubr.f32.gmra.mrb[0].mxu0 %v63
    %v188 = vpop.f32.mrb[0].mxu0
    %v189 = vadd.f32 %v115, %v188
    %v190 = vpop.f32.mrb[0].mxu0
    %191 = vmatprep.mubr.f32.mxu0 0.0
    %192 = vmatmul.mubr.f32.gmra.mrb[0].mxu0 %v64
    %v193 = vpop.f32.mrb[0].mxu0
    %v194 = vadd.f32 %v115, %v193
    %v195 = vpop.f32.mrb[0].mxu0
    %196 = vmatprep.mubr.f32.mxu0 0.0
    %197 = vmatmul.mubr.f32.gmra.mrb[0].mxu0 %v65
    %v198 = vpop.f32.mrb[0].mxu0
    %v199 = vadd.f32 %v115, %v198
    %v200 = vpop.f32.mrb[0].mxu0
    %201 = vmatprep.mubr.f32.mxu0 0.0
    %202 = vmatmul.mubr.f32.gmra.mrb[0].mxu0 %v66
    %v203 = vpop.f32.mrb[0].mxu0
    %v204 = vadd.f32 %v115, %v203
    %v205 = vpop.f32.mrb[0].mxu0
    %206 = vmatprep.mubr.f32.mxu0 0.0
    %207 = vmatmul.mubr.f32.gmra.mrb[0].mxu0 %v67
    %v208 = vpop.f32.mrb[0].mxu0
    %v209 = vadd.f32 %v115, %v208
    %v210 = vpop.f32.mrb[0].mxu0
    %211 = vmatprep.mubr.f32.mxu0 0.0
    %212 = vmatmul.mubr.f32.gmra.mrb[0].mxu0 %v68
    %v213 = vpop.f32.mrb[0].mxu0
    %v214 = vadd.f32 %v115, %v213
    %v215 = vpop.f32.mrb[0].mxu0
    %216 = vmatprep.mubr.f32.mxu0 0.0
    %217 = vmatmul.mubr.f32.gmra.mrb[0].mxu0 %v69
    %v218 = vpop.f32.mrb[0].mxu0
    %v219 = vadd.f32 %v115, %v218
    %v220 = vpop.f32.mrb[0].mxu0
    %221 = vmatprep.mubr.f32.mxu0 0.0
    %222 = vmatmul.mubr.f32.gmra.mrb[0].mxu0 %v70
    %v223 = vpop.f32.mrb[0].mxu0
    %v224 = vadd.f32 %v115, %v223
    %v225 = vpop.f32.mrb[0].mxu0
    %226 = vmatprep.mubr.f32.mxu0 0.0
    %227 = vmatmul.mubr.f32.gmra.mrb[0].mxu0 %v71
    %v228 = vpop.f32.mrb[0].mxu0
    %v229 = vadd.f32 %v115, %v228
    %v230 = vpop.f32.mrb[0].mxu0
    %231 = vmatprep.mubr.f32.mxu0 0.0
    %232 = vmatmul.mubr.f32.gmra.mrb[0].mxu0 %v72
    %v233 = vpop.f32.mrb[0].mxu0
    %v234 = vadd.f32 %v115, %v233
    %v235 = vpop.f32.mrb[0].mxu0
    %236 = vmatprep.mubr.f32.mxu0 0.0
    %237 = vmatmul.mubr.f32.gmra.mrb[0].mxu0 %v73
    %v238 = vpop.f32.mrb[0].mxu0
    %v239 = vadd.f32 %v115, %v238
    %v240 = vpop.f32.mrb[0].mxu0
    %241 = vmatprep.mubr.f32.mxu0 0.0
    %242 = vmatmul.mubr.f32.gmra.mrb[0].mxu0 %v74
    %v243 = vpop.f32.mrb[0].mxu0
    %v244 = vadd.f32 %v115, %v243
    %v245 = vpop.f32.mrb[0].mxu0
    %246 = vmatprep.mubr.f32.mxu0 0.0
    %247 = vmatmul.mubr.f32.gmra.mrb[0].mxu0 %v75
    %v248 = vpop.f32.mrb[0].mxu0
    %v249 = vadd.f32 %v115, %v248
    %v250 = vpop.f32.mrb[0].mxu0
    %251 = vmatprep.mubr.f32.mxu0 0.0
    %252 = vmatmul.mubr.f32.gmra.mrb[0].mxu0 %v76
    %v253 = vpop.f32.mrb[0].mxu0
    %v254 = vadd.f32 %v115, %v253
    %v255 = vpop.f32.mrb[0].mxu0
    %256 = vmatprep.mubr.f32.mxu0 0.0
    %257 = vmatmul.mubr.f32.gmra.mrb[0].mxu0 %v77
    %v258 = vpop.f32.mrb[0].mxu0
    %v259 = vadd.f32 %v115, %v258
    %v260 = vpop.f32.mrb[0].mxu0
    %261 = vdwg.mxu0
    %v262 = vmul.f32 %v184, 0.5
    %v263 = vmul.f32 %v189, 0.5
    %v264 = vmul.f32 %v194, 0.5
    %v265 = vmul.f32 %v199, 0.5
    %v266 = vmul.f32 %v204, 0.5
    %v267 = vmul.f32 %v209, 0.5
    %v268 = vmul.f32 %v214, 0.5
    %v269 = vmul.f32 %v219, 0.5
    %v270 = vmul.f32 %v224, 0.5
    %v271 = vmul.f32 %v229, 0.5
    %v272 = vmul.f32 %v234, 0.5
    %v273 = vmul.f32 %v239, 0.5
    %v274 = vmul.f32 %v244, 0.5
    %v275 = vmul.f32 %v249, 0.5
    %v276 = vmul.f32 %v254, 0.5
    %v277 = vmul.f32 %v259, 0.5
    %v278 = vmul.f32 %v184, 0.70710677
    %v279 = vmul.f32 %v189, 0.70710677
    %v280 = vmul.f32 %v194, 0.70710677
    %v281 = vmul.f32 %v199, 0.70710677
    %v282 = vmul.f32 %v204, 0.70710677
    %v283 = vmul.f32 %v209, 0.70710677
    %v284 = vmul.f32 %v214, 0.70710677
    %v285 = vmul.f32 %v219, 0.70710677
    %v286 = vmul.f32 %v224, 0.70710677
    %v287 = vmul.f32 %v229, 0.70710677
    %v288 = vmul.f32 %v234, 0.70710677
    %v289 = vmul.f32 %v239, 0.70710677
    %v290 = vmul.f32 %v244, 0.70710677
    %v291 = vmul.f32 %v249, 0.70710677
    %v292 = vmul.f32 %v254, 0.70710677
    %v293 = vmul.f32 %v259, 0.70710677
    %v294 = verf.f32.pop %v278
    %v295 = verf.f32.pop %v279
    %v296 = verf.f32.pop %v280
    %v297 = verf.f32.pop %v281
    %v298 = verf.f32.pop %v282
    %v299 = verf.f32.pop %v283
    %v300 = verf.f32.pop %v284
    %v301 = verf.f32.pop %v285
    %v302 = verf.f32.pop %v286
    %v303 = verf.f32.pop %v287
    %v304 = verf.f32.pop %v288
    %v305 = verf.f32.pop %v289
    %v306 = verf.f32.pop %v290
    %v307 = verf.f32.pop %v291
    %v308 = verf.f32.pop %v292
    %v309 = verf.f32.pop %v293
    %v310 = vadd.f32 %v294, 1.0
    %v311 = vadd.f32 %v295, 1.0
    %v312 = vadd.f32 %v296, 1.0
    %v313 = vadd.f32 %v297, 1.0
    %v314 = vadd.f32 %v298, 1.0
    %v315 = vadd.f32 %v299, 1.0
    %v316 = vadd.f32 %v300, 1.0
    %v317 = vadd.f32 %v301, 1.0
    %v318 = vadd.f32 %v302, 1.0
    %v319 = vadd.f32 %v303, 1.0
    %v320 = vadd.f32 %v304, 1.0
    %v321 = vadd.f32 %v305, 1.0
    %v322 = vadd.f32 %v306, 1.0
    %v323 = vadd.f32 %v307, 1.0
    %v324 = vadd.f32 %v308, 1.0
    %v325 = vadd.f32 %v309, 1.0
    %v326 = vmul.f32 %v262, %v310
    %v327 = vmul.f32 %v263, %v311
    %v328 = vmul.f32 %v264, %v312
    %v329 = vmul.f32 %v265, %v313
    %v330 = vmul.f32 %v266, %v314
    %v331 = vmul.f32 %v267, %v315
    %v332 = vmul.f32 %v268, %v316
    %v333 = vmul.f32 %v269, %v317
    %v334 = vmul.f32 %v270, %v318
    %v335 = vmul.f32 %v271, %v319
    %v336 = vmul.f32 %v272, %v320
    %v337 = vmul.f32 %v273, %v321
    %v338 = vmul.f32 %v274, %v322
    %v339 = vmul.f32 %v275, %v323
    %v340 = vmul.f32 %v276, %v324
    %v341 = vmul.f32 %v277, %v325
    %v342 = vld [vmem:[%s4] sm:$0x1]
    %v344 = vlaneseq
    %v345 = vshrl.u32 %v344, 7
    %v346 = vsub.s32 0, %v345
    %v347 = vrot.slane %v342, %v346
    %349 = vmatprep.subr.mxu0 0.0
    %350 = vmatpush1.msra.mxu0 %v94
    %351 = vmatprep.subr.mxu0 0.0
    %352 = vmatpush1.msra.mxu0 %v95
    %353 = vmatprep.subr.mxu0 0.0
    %354 = vmatpush1.msra.mxu0 %v96
    %355 = vmatprep.subr.mxu0 0.0
    %356 = vmatpush1.msra.mxu0 %v97
    %357 = vmatprep.subr.mxu0 0.0
    %358 = vmatpush1.msra.mxu0 %v98
    %359 = vmatprep.subr.mxu0 0.0
    %360 = vmatpush1.msra.mxu0 %v99
    %361 = vmatprep.subr.mxu0 0.0
    %362 = vmatpush1.msra.mxu0 %v100
    %363 = vmatprep.subr.mxu0 0.0
    %364 = vmatpush1.msra.mxu0 %v101
    %365 = vmatprep.subr.mxu0 0.0
    %366 = vmatpush1.msra.mxu0 %v102
    %367 = vmatprep.subr.mxu0 0.0
    %368 = vmatpush1.msra.mxu0 %v103
    %369 = vmatprep.subr.mxu0 0.0
    %370 = vmatpush1.msra.mxu0 %v104
    %371 = vmatprep.subr.mxu0 0.0
    %372 = vmatpush1.msra.mxu0 %v105
    %373 = vmatprep.subr.mxu0 0.0
    %374 = vmatpush1.msra.mxu0 %v106
    %375 = vmatprep.subr.mxu0 0.0
    %376 = vmatpush1.msra.mxu0 %v107
    %377 = vmatprep.subr.mxu0 0.0
    %378 = vmatpush1.msra.mxu0 %v108
    %379 = vmatprep.subr.mxu0 0.0
    %380 = vmatpush1.msra.mxu0 %v109
    %381 = vmatprep.subr.mxu0 0.0
    %382 = vmatpush1.msra.mxu0 0.0
    %383 = vmatprep.subr.mxu0 0.0
    %384 = vmatpush1.msra.mxu0 0.0
    %385 = vmatprep.subr.mxu0 0.0
    %386 = vmatpush1.msra.mxu0 0.0
    %387 = vmatprep.subr.mxu0 0.0
    %388 = vmatpush1.msra.mxu0 0.0
    %389 = vmatprep.subr.mxu0 0.0
    %390 = vmatpush1.msra.mxu0 0.0
    %391 = vmatprep.subr.mxu0 0.0
    %392 = vmatpush1.msra.mxu0 0.0
    %393 = vmatprep.subr.mxu0 0.0
    %394 = vmatpush1.msra.mxu0 0.0
    %395 = vmatprep.subr.mxu0 0.0
    %396 = vmatpush1.msra.mxu0 0.0
    %397 = vmatprep.subr.mxu0 0.0
    %398 = vmatpush1.msra.mxu0 0.0
    %399 = vmatprep.subr.mxu0 0.0
    %400 = vmatpush1.msra.mxu0 0.0
    %401 = vmatprep.subr.mxu0 0.0
    %402 = vmatpush1.msra.mxu0 0.0
    %403 = vmatprep.subr.mxu0 0.0
    %404 = vmatpush1.msra.mxu0 0.0
    %405 = vmatprep.subr.mxu0 0.0
    %406 = vmatpush1.msra.mxu0 0.0
    %407 = vmatprep.subr.mxu0 0.0
    %408 = vmatpush1.msra.mxu0 0.0
    %409 = vmatprep.subr.mxu0 0.0
    %410 = vmatpush1.msra.mxu0 0.0
    %411 = vmatprep.subr.mxu0 0.0
    %412 = vmatpush1.msra.mxu0 0.0
    %413 = vmatprep.mubr.f32.mxu0 0.0
    %414 = vmatmul.mubr.f32.gmra.mrb[0].mxu0 %v326
    %v415 = vpop.f32.mrb[0].mxu0
    %v416 = vadd.f32 %v347, %v415
    %v417 = vpop.f32.mrb[0].mxu0
    %418 = vmatprep.mubr.f32.mxu0 0.0
    %419 = vmatmul.mubr.f32.gmra.mrb[0].mxu0 %v327
    %v420 = vpop.f32.mrb[0].mxu0
    %v421 = vadd.f32 %v347, %v420
    %v422 = vpop.f32.mrb[0].mxu0
    %423 = vmatprep.mubr.f32.mxu0 0.0
    %424 = vmatmul.mubr.f32.gmra.mrb[0].mxu0 %v328
    %v425 = vpop.f32.mrb[0].mxu0
    %v426 = vadd.f32 %v347, %v425
    %v427 = vpop.f32.mrb[0].mxu0
    %428 = vmatprep.mubr.f32.mxu0 0.0
    %429 = vmatmul.mubr.f32.gmra.mrb[0].mxu0 %v329
    %v430 = vpop.f32.mrb[0].mxu0
    %v431 = vadd.f32 %v347, %v430
    %v432 = vpop.f32.mrb[0].mxu0
    %433 = vmatprep.mubr.f32.mxu0 0.0
    %434 = vmatmul.mubr.f32.gmra.mrb[0].mxu0 %v330
    %v435 = vpop.f32.mrb[0].mxu0
    %v436 = vadd.f32 %v347, %v435
    %v437 = vpop.f32.mrb[0].mxu0
    %438 = vmatprep.mubr.f32.mxu0 0.0
    %439 = vmatmul.mubr.f32.gmra.mrb[0].mxu0 %v331
    %v440 = vpop.f32.mrb[0].mxu0
    %v441 = vadd.f32 %v347, %v440
    %v442 = vpop.f32.mrb[0].mxu0
    %443 = vmatprep.mubr.f32.mxu0 0.0
    %444 = vmatmul.mubr.f32.gmra.mrb[0].mxu0 %v332
    %v445 = vpop.f32.mrb[0].mxu0
    %v446 = vadd.f32 %v347, %v445
    %v447 = vpop.f32.mrb[0].mxu0
    %448 = vmatprep.mubr.f32.mxu0 0.0
    %449 = vmatmul.mubr.f32.gmra.mrb[0].mxu0 %v333
    %v450 = vpop.f32.mrb[0].mxu0
    %v451 = vadd.f32 %v347, %v450
    %v452 = vpop.f32.mrb[0].mxu0
    %453 = vmatprep.mubr.f32.mxu0 0.0
    %454 = vmatmul.mubr.f32.gmra.mrb[0].mxu0 %v334
    %v455 = vpop.f32.mrb[0].mxu0
    %v456 = vadd.f32 %v347, %v455
    %v457 = vpop.f32.mrb[0].mxu0
    %458 = vmatprep.mubr.f32.mxu0 0.0
    %459 = vmatmul.mubr.f32.gmra.mrb[0].mxu0 %v335
    %v460 = vpop.f32.mrb[0].mxu0
    %v461 = vadd.f32 %v347, %v460
    %v462 = vpop.f32.mrb[0].mxu0
    %463 = vmatprep.mubr.f32.mxu0 0.0
    %464 = vmatmul.mubr.f32.gmra.mrb[0].mxu0 %v336
    %v465 = vpop.f32.mrb[0].mxu0
    %v466 = vadd.f32 %v347, %v465
    %v467 = vpop.f32.mrb[0].mxu0
    %468 = vmatprep.mubr.f32.mxu0 0.0
    %469 = vmatmul.mubr.f32.gmra.mrb[0].mxu0 %v337
    %v470 = vpop.f32.mrb[0].mxu0
    %v471 = vadd.f32 %v347, %v470
    %v472 = vpop.f32.mrb[0].mxu0
    %473 = vmatprep.mubr.f32.mxu0 0.0
    %474 = vmatmul.mubr.f32.gmra.mrb[0].mxu0 %v338
    %v475 = vpop.f32.mrb[0].mxu0
    %v476 = vadd.f32 %v347, %v475
    %v477 = vpop.f32.mrb[0].mxu0
    %478 = vmatprep.mubr.f32.mxu0 0.0
    %479 = vmatmul.mubr.f32.gmra.mrb[0].mxu0 %v339
    %v480 = vpop.f32.mrb[0].mxu0
    %v481 = vadd.f32 %v347, %v480
    %v482 = vpop.f32.mrb[0].mxu0
    %483 = vmatprep.mubr.f32.mxu0 0.0
    %484 = vmatmul.mubr.f32.gmra.mrb[0].mxu0 %v340
    %v485 = vpop.f32.mrb[0].mxu0
    %v486 = vadd.f32 %v347, %v485
    %v487 = vpop.f32.mrb[0].mxu0
    %488 = vmatprep.mubr.f32.mxu0 0.0
    %489 = vmatmul.mubr.f32.gmra.mrb[0].mxu0 %v341
    %v490 = vpop.f32.mrb[0].mxu0
    %v491 = vadd.f32 %v347, %v490
    %v492 = vpop.f32.mrb[0].mxu0
    %493 = vdwg.mxu0
    %494 = vst [vmem:[#allocation8] sm:$0xff] %v416
    %495 = vst [vmem:[#allocation8 + $0x8] sm:$0xff] %v421
    %496 = vst [vmem:[#allocation8 + $0x10] sm:$0xff] %v426
    %497 = vst [vmem:[#allocation8 + $0x18] sm:$0xff] %v431
    %498 = vst [vmem:[#allocation8 + $0x20] sm:$0xff] %v436
    %499 = vst [vmem:[#allocation8 + $0x28] sm:$0xff] %v441
    %500 = vst [vmem:[#allocation8 + $0x30] sm:$0xff] %v446
    %501 = vst [vmem:[#allocation8 + $0x38] sm:$0xff] %v451
    %502 = vst [vmem:[#allocation8 + $0x40] sm:$0xff] %v456
    %503 = vst [vmem:[#allocation8 + $0x48] sm:$0xff] %v461
    %504 = vst [vmem:[#allocation8 + $0x50] sm:$0xff] %v466
    %505 = vst [vmem:[#allocation8 + $0x58] sm:$0xff] %v471
    %506 = vst [vmem:[#allocation8 + $0x60] sm:$0xff] %v476
    %507 = vst [vmem:[#allocation8 + $0x68] sm:$0xff] %v481
    %508 = vst [vmem:[#allocation8 + $0x70] sm:$0xff] %v486
    %509 = vst [vmem:[#allocation8 + $0x78] sm:$0xff] %v491
    // Predicated region
    $region34: #{tpu_custom_call.1} parent=1 // pred_check
      _
    $region35: #{tpu_custom_call.1} parent=1 // pred_check_branch
      %511 = sbr.rel (0) target = $region37
    $region36: #{tpu_custom_call.1} parent=1 // pred_region
      %s513 = ssub.s32 2048, 2048
      %514 = vsyncadd [#allocation4], %s513
      %s515 = sshll.u32 [#allocation8], 4
      %s516 = int_to_ptr.vmem [resolvable:$true] %s515
      %521 = dma.vmem_to_hbm [thread:$0]  %s516, 2048, %s5, [#allocation4], 128, 128, 8
    $region37: #{tpu_custom_call.1} parent=1 // pred_fallthru
      _
    // Predicated region
    $region38: #{tpu_custom_call.1} parent=1 // pred_check
      _
    $region39: #{tpu_custom_call.1} parent=1 // pred_check_branch
      %523 = sbr.rel (0) target = $region41
    $region40: #{tpu_custom_call.1} parent=1 // pred_region
      %524 = dma.done [#allocation4], 2048
    $region41: #{tpu_custom_call.1} parent=1 // pred_fallthru
      _
    %525 = vsyncpa [#allocation3], 1
    %526 = vsyncpa [#allocation6], 1
    %527 = vsyncpa [#allocation4], 1

</llo_original>
